<compile_context>
chip_gen: v6e
topology: v6e:2x2x1
jax: 0.10.0
libtpu: 0.0.40
codegen_flags: <defaults>
</compile_context>

<pallas_src>
import jax
import jax.numpy as jnp
from jax.experimental import pallas as pl
from jax.experimental.pallas import tpu as pltpu

LANE = 128
SUBLANE = 8


def _round_up(x, m):
    return (x + m - 1) // m * m


def _choose_tn(n):
    """Row tile: capped at 256, and small enough to give >=2 grid steps when N allows."""
    half = -(-n // 2)
    return max(SUBLANE, min(256, _round_up(half, SUBLANE)))


def _encoder_kernel(x_ref, h_ref, fcw_ref, fcb_ref, wc_ref, whn_ref, bc_ref, bhn_ref, o_ref):
    Hp = h_ref.shape[-1]

    h = h_ref[...]                      # f32: needed for z*h and gate math
    h_bf = h.astype(jnp.bfloat16)       # single bf16 copy for the MXU

    # fc + ReLU : bf16 MXU matmul, f32 accumulate, f32 elementwise
    xfc = jnp.dot(x_ref[...], fcw_ref[...],
                  preferred_element_type=jnp.float32) + fcb_ref[...]
    xfc = jnp.maximum(xfc, 0.0)

    # Fused GRU projection: one K=2*Hp matmul covers i_r+h_r | i_z+h_z | i_n
    xh = jnp.concatenate([xfc.astype(jnp.bfloat16), h_bf], axis=-1)   # [TN, 2Hp] bf16
    g = jnp.dot(xh, wc_ref[...], preferred_element_type=jnp.float32) + bc_ref[...]

    # Separate small matmul for the hidden->n projection (multiplied by r below)
    h_n = jnp.dot(h_bf, whn_ref[...], preferred_element_type=jnp.float32) + bhn_ref[...]

    # sigmoid over the contiguous [TN, 2Hp] r|z slab with ONE tanh push:
    # sigmoid(v) = 0.5*(tanh(0.5*v)+1)
    rz = 0.5 * (jnp.tanh(0.5 * g[:, :2 * Hp]) + 1.0)
    r = rz[:, :Hp]
    z = rz[:, Hp:]
    n = jnp.tanh(g[:, 2 * Hp:] + r * h_n)

    o_ref[...] = ((1.0 - z) * n + z * h).astype(o_ref.dtype)


def encoder_step_padded(x_pad, h_pad, params, tn):
    """One recurrent step on already-padded buffers (the fast path).

    x_pad: [N_pad, IN]  bf16 (padded rows zero)
    h_pad: [N_pad, Hp]  f32  (padded rows/lanes zero)
    returns new h_pad [N_pad, Hp] f32 (padded lanes stay exactly zero).
    """
    N_pad, IN = x_pad.shape
    Hp = h_pad.shape[-1]
    assert N_pad % tn == 0 and tn % SUBLANE == 0

    row_spec = lambda cols: pl.BlockSpec((tn, cols), lambda i: (i, 0))
    const_spec = lambda r, c: pl.BlockSpec((r, c), lambda i: (0, 0))

    return pl.pallas_call(
        _encoder_kernel,
        out_shape=jax.ShapeDtypeStruct((N_pad, Hp), jnp.float32),
        grid=(N_pad // tn,),
        in_specs=[
            row_spec(IN),                 # x tile (bf16)
            row_spec(Hp),                 # h tile (f32)
            const_spec(IN, Hp),           # fc_w     (resident)
            const_spec(1, Hp),            # fc_b
            const_spec(2 * Hp, 3 * Hp),   # fused W_c = [[W_ih r|z|n],[W_hh r|z|0]]
            const_spec(Hp, Hp),           # W_hh_n
            const_spec(1, 3 * Hp),        # fused bias b_ih + [b_hh_r, b_hh_z, 0]
            const_spec(1, Hp),            # b_hh_n
        ],
        out_specs=row_spec(Hp),
        input_output_aliases={1: 0},      # new hidden overwrites the carried padded state
        compiler_params=pltpu.CompilerParams(
            dimension_semantics=("parallel",)),
    )(x_pad, h_pad, params["fc_w"], params["fc_b"],
      params["w_c"], params["w_hn"], params["b_c"], params["b_hn"])


def encoder_forward(inputs, hidden_states, params):
    """Module-faithful single step.

    inputs: [N, input_shape] f32; hidden_states: [bs, n_agents, H] f32 -> [N, H] f32.
    """
    H = hidden_states.shape[-1]
    Hp = params["fc_w"].shape[1]
    N, IN = inputs.shape

    TN = _choose_tn(N)
    N_pad = _round_up(N, TN)

    h_in = hidden_states.reshape(-1, H).astype(jnp.float32)
    if N_pad == N and Hp == H:
        x_pad = inputs.astype(jnp.bfloat16)
        h_pad = h_in
    else:
        x_pad = jnp.zeros((N_pad, IN), jnp.bfloat16).at[:N].set(inputs.astype(jnp.bfloat16))
        h_pad = jnp.zeros((N_pad, Hp), jnp.float32).at[:N, :H].set(h_in)

    out = encoder_step_padded(x_pad, h_pad, params, TN)
    if N_pad == N and Hp == H:
        return out
    return out[:N, :H]


def init_raw_params(key, input_shape, H):
    """Unpadded f32 parameters, PyTorch-default-style uniform init.
    Weights stored transposed relative to PyTorch ([in, out]); gate order (r, z, n)."""
    ks = jax.random.split(key, 6)
    s_fc = 1.0 / jnp.sqrt(input_shape)
    s_gru = 1.0 / jnp.sqrt(H)
    u = lambda k, shape, s: jax.random.uniform(k, shape, jnp.float32, -s, s)
    return {
        "fc_w": u(ks[0], (input_shape, H), s_fc),
        "fc_b": u(ks[1], (1, H), s_fc),
        "w_ih": u(ks[2], (H, 3 * H), s_gru),
        "w_hh": u(ks[3], (H, 3 * H), s_gru),
        "b_ih": u(ks[4], (1, 3 * H), s_gru),
        "b_hh": u(ks[5], (1, 3 * H), s_gru),
    }


def pack_params(raw, H):
    """Pad H -> Hp=round_up(H,128), each gate in its own Hp-wide lane slab, fuse GRU weights/biases.

    Invariant: every padded weight/bias lane is exactly zero, so padded lanes of a carried
    hidden state satisfy new_h_pad_lane = (1-0.5)*tanh(0) + 0.5*h_pad_lane = 0.5*h_pad_lane,
    i.e. they stay exactly zero if they start at zero.
    """
    Hp = _round_up(H, LANE)
    IN = raw["fc_w"].shape[0]

    fc_w = jnp.zeros((IN, Hp), jnp.float32).at[:, :H].set(raw["fc_w"])
    fc_b = jnp.zeros((1, Hp), jnp.float32).at[:, :H].set(raw["fc_b"])

    # Fused GRU weight: rows 0:Hp = W_ih (gates r|z|n), rows Hp:2Hp = W_hh (gates r|z only).
    w_c = jnp.zeros((2 * Hp, 3 * Hp), jnp.float32)
    for g in range(3):
        w_c = w_c.at[:H, g * Hp:g * Hp + H].set(raw["w_ih"][:, g * H:(g + 1) * H])
    for g in range(2):  # r, z from W_hh
        w_c = w_c.at[Hp:Hp + H, g * Hp:g * Hp + H].set(raw["w_hh"][:, g * H:(g + 1) * H])

    w_hn = jnp.zeros((Hp, Hp), jnp.float32).at[:H, :H].set(raw["w_hh"][:, 2 * H:])

    # Fused bias: b_ih(r|z|n) + [b_hh_r, b_hh_z, 0]; b_hh_n stays separate (inside the r* term).
    b_c = jnp.zeros((1, 3 * Hp), jnp.float32)
    for g in range(3):
        b_c = b_c.at[:, g * Hp:g * Hp + H].set(raw["b_ih"][:, g * H:(g + 1) * H])
    for g in range(2):
        b_c = b_c.at[:, g * Hp:g * Hp + H].add(raw["b_hh"][:, g * H:(g + 1) * H])
    b_hn = jnp.zeros((1, Hp), jnp.float32).at[:, :H].set(raw["b_hh"][:, 2 * H:])

    return {
        "fc_w": fc_w.astype(jnp.bfloat16),
        "fc_b": fc_b,                               # biases stay f32
        "w_c": w_c.astype(jnp.bfloat16),
        "w_hn": w_hn.astype(jnp.bfloat16),
        "b_c": b_c,
        "b_hn": b_hn,
    }


def encoder_reference(inputs, hidden_states, raw):
    """Pure-JAX f32 reference matching PyTorch F.relu(fc(x)) + GRUCell semantics."""
    H = raw["fc_w"].shape[1]
    h = hidden_states.reshape(-1, H)
    x = jnp.maximum(inputs @ raw["fc_w"] + raw["fc_b"], 0.0)
    gi = x @ raw["w_ih"] + raw["b_ih"]
    gh = h @ raw["w_hh"] + raw["b_hh"]
    i_r, i_z, i_n = gi[:, :H], gi[:, H:2 * H], gi[:, 2 * H:]
    h_r, h_z, h_n = gh[:, :H], gh[:, H:2 * H], gh[:, 2 * H:]
    r = jax.nn.sigmoid(i_r + h_r)
    z = jax.nn.sigmoid(i_z + h_z)
    n = jnp.tanh(i_n + r * h_n)
    return (1.0 - z) * n + z * h


if __name__ == "__main__":
    bs, n_agents = 2, 4
    input_shape, rnn_hidden_dim = 16, 32
    N = bs * n_agents

    key = jax.random.PRNGKey(0)
    k_in, k_h, k_p, k_seq = jax.random.split(key, 4)

    inputs = jax.random.normal(k_in, (N, input_shape), jnp.float32)
    hidden_states = jax.random.normal(k_h, (bs, n_agents, rnn_hidden_dim), jnp.float32)

    raw = init_raw_params(k_p, input_shape, rnn_hidden_dim)
    params = pack_params(raw, rnn_hidden_dim)
    Hp = params["fc_w"].shape[1]

    # --- single step through the module-faithful wrapper -------------------------------
    fwd = jax.jit(encoder_forward)
    h_out = fwd(inputs, hidden_states, params)
    jax.block_until_ready(h_out)

    h_ref = encoder_reference(inputs, hidden_states, raw)
    assert h_out.shape == (N, rnn_hidden_dim)
    max_err = float(jnp.max(jnp.abs(h_out - h_ref)))
    # bf16 MXU operands with f32 accumulation -> loosened tolerance vs f32 reference
    assert jnp.allclose(h_out, h_ref, atol=2e-2, rtol=2e-2), \
        f"single-step mismatch vs reference (max abs err {max_err})"

    # --- multi-step rollout carrying the PADDED state (fast path, no per-step repack) ---
    T = 4
    xs = jax.random.normal(k_seq, (T, N, input_shape), jnp.float32)
    TN = _choose_tn(N)
    N_pad = _round_up(N, TN)

    step = jax.jit(encoder_step_padded, static_argnums=3)
    h_pad = jnp.zeros((N_pad, Hp), jnp.float32).at[:N, :rnn_hidden_dim].set(
        hidden_states.reshape(-1, rnn_hidden_dim))
    h_ref_t = hidden_states.reshape(-1, rnn_hidden_dim)
    for t in range(T):
        x_pad = jnp.zeros((N_pad, input_shape), jnp.bfloat16).at[:N].set(
            xs[t].astype(jnp.bfloat16))
        h_pad = step(x_pad, h_pad, params, TN)
        h_ref_t = encoder_reference(xs[t], h_ref_t, raw)
    jax.block_until_ready(h_pad)

    max_err_T = float(jnp.max(jnp.abs(h_pad[:N, :rnn_hidden_dim] - h_ref_t)))
    assert jnp.allclose(h_pad[:N, :rnn_hidden_dim], h_ref_t, atol=5e-2, rtol=5e-2), \
        f"{T}-step rollout mismatch vs reference (max abs err {max_err_T})"
    # padded lanes of the carried state must stay exactly zero
    assert float(jnp.max(jnp.abs(h_pad[:, rnn_hidden_dim:]))) == 0.0

    print("KERNEL_OK")
</pallas_src>

<mosaic_0001>
module attributes {stable_mosaic.version = 11 : i64} {
  func.func @_encoder_kernel(%arg0: i32, %arg1: memref<8x16xbf16, #tpu.memory_space<vmem>>, %arg2: memref<8x128xf32, #tpu.memory_space<vmem>>, %arg3: memref<16x128xbf16, #tpu.memory_space<vmem>>, %arg4: memref<1x128xf32, #tpu.memory_space<vmem>>, %arg5: memref<256x384xbf16, #tpu.memory_space<vmem>>, %arg6: memref<128x128xbf16, #tpu.memory_space<vmem>>, %arg7: memref<1x384xf32, #tpu.memory_space<vmem>>, %arg8: memref<1x128xf32, #tpu.memory_space<vmem>>, %arg9: memref<8x128xf32, #tpu.memory_space<vmem>>) attributes {dimension_semantics = [#tpu.dimension_semantics<parallel>], iteration_bounds = array<i64: 1>, scalar_prefetch = 0 : i64, scratch_operands = 0 : i64, tpu.core_type = #tpu.core_type<tc>, window_params = [{transform_indices = @transform_0, window_bounds = array<i64: 8, 16>}, {transform_indices = @transform_1, window_bounds = array<i64: 8, 128>}, {pipeline_mode = #tpu.pipeline_mode<synchronous>, transform_indices = @transform_2, window_bounds = array<i64: 16, 128>}, {pipeline_mode = #tpu.pipeline_mode<synchronous>, transform_indices = @transform_3, window_bounds = array<i64: 1, 128>}, {pipeline_mode = #tpu.pipeline_mode<synchronous>, transform_indices = @transform_4, window_bounds = array<i64: 256, 384>}, {pipeline_mode = #tpu.pipeline_mode<synchronous>, transform_indices = @transform_5, window_bounds = array<i64: 128, 128>}, {pipeline_mode = #tpu.pipeline_mode<synchronous>, transform_indices = @transform_6, window_bounds = array<i64: 1, 384>}, {pipeline_mode = #tpu.pipeline_mode<synchronous>, transform_indices = @transform_7, window_bounds = array<i64: 1, 128>}, {transform_indices = @transform_8, window_bounds = array<i64: 8, 128>}]} {
    %c0 = arith.constant 0 : index
    %c0_0 = arith.constant 0 : index
    %0 = vector.load %arg2[%c0, %c0_0] : memref<8x128xf32, #tpu.memory_space<vmem>>, vector<8x128xf32>
    %1 = arith.truncf %0 : vector<8x128xf32> to vector<8x128xbf16>
    %c0_1 = arith.constant 0 : index
    %c0_2 = arith.constant 0 : index
    %2 = vector.load %arg1[%c0_1, %c0_2] : memref<8x16xbf16, #tpu.memory_space<vmem>>, vector<8x16xbf16>
    %c0_3 = arith.constant 0 : index
    %c0_4 = arith.constant 0 : index
    %3 = vector.load %arg3[%c0_3, %c0_4] : memref<16x128xbf16, #tpu.memory_space<vmem>>, vector<16x128xbf16>
    %cst = arith.constant dense<0.000000e+00> : vector<8x128xf32>
    %4 = tpu.matmul %2, %3, %cst {dimension_numbers = #tpu.dot_dimension_numbers<[1], [0], [0], [1], [0, 0, 1, 1], [], []>} : vector<8x16xbf16>, vector<16x128xbf16>, vector<8x128xf32> -> vector<8x128xf32>
    %c0_5 = arith.constant 0 : index
    %c0_6 = arith.constant 0 : index
    %5 = vector.load %arg4[%c0_5, %c0_6] : memref<1x128xf32, #tpu.memory_space<vmem>>, vector<1x128xf32>
    %6 = vector.broadcast %5 : vector<1x128xf32> to vector<8x128xf32>
    %7 = arith.addf %4, %6 : vector<8x128xf32>
    %cst_7 = arith.constant 0.000000e+00 : f32
    %8 = vector.broadcast %cst_7 : f32 to vector<8x128xf32>
    %9 = arith.maximumf %7, %8 : vector<8x128xf32>
    %10 = arith.truncf %9 : vector<8x128xf32> to vector<8x128xbf16>
    %11 = tpu.concatenate %10, %1 in 1 : vector<8x128xbf16>, vector<8x128xbf16> -> vector<8x256xbf16>
    %c0_8 = arith.constant 0 : index
    %c0_9 = arith.constant 0 : index
    %12 = vector.load %arg5[%c0_8, %c0_9] : memref<256x384xbf16, #tpu.memory_space<vmem>>, vector<256x384xbf16>
    %cst_10 = arith.constant dense<0.000000e+00> : vector<8x384xf32>
    %13 = tpu.matmul %11, %12, %cst_10 {dimension_numbers = #tpu.dot_dimension_numbers<[1], [0], [0], [1], [0, 0, 1, 1], [], []>} : vector<8x256xbf16>, vector<256x384xbf16>, vector<8x384xf32> -> vector<8x384xf32>
    %c0_11 = arith.constant 0 : index
    %c0_12 = arith.constant 0 : index
    %14 = vector.load %arg7[%c0_11, %c0_12] : memref<1x384xf32, #tpu.memory_space<vmem>>, vector<1x384xf32>
    %15 = vector.broadcast %14 : vector<1x384xf32> to vector<8x384xf32>
    %16 = arith.addf %13, %15 : vector<8x384xf32>
    %c0_13 = arith.constant 0 : index
    %c0_14 = arith.constant 0 : index
    %17 = vector.load %arg6[%c0_13, %c0_14] : memref<128x128xbf16, #tpu.memory_space<vmem>>, vector<128x128xbf16>
    %cst_15 = arith.constant dense<0.000000e+00> : vector<8x128xf32>
    %18 = tpu.matmul %1, %17, %cst_15 {dimension_numbers = #tpu.dot_dimension_numbers<[1], [0], [0], [1], [0, 0, 1, 1], [], []>} : vector<8x128xbf16>, vector<128x128xbf16>, vector<8x128xf32> -> vector<8x128xf32>
    %c0_16 = arith.constant 0 : index
    %c0_17 = arith.constant 0 : index
    %19 = vector.load %arg8[%c0_16, %c0_17] : memref<1x128xf32, #tpu.memory_space<vmem>>, vector<1x128xf32>
    %20 = vector.broadcast %19 : vector<1x128xf32> to vector<8x128xf32>
    %21 = arith.addf %18, %20 : vector<8x128xf32>
    %22 = vector.extract_strided_slice %16 {offsets = [0, 0], sizes = [8, 256], strides = [1, 1]} : vector<8x384xf32> to vector<8x256xf32>
    %cst_18 = arith.constant 5.000000e-01 : f32
    %23 = vector.broadcast %cst_18 : f32 to vector<8x256xf32>
    %24 = arith.mulf %23, %22 : vector<8x256xf32>
    %25 = math.tanh %24 : vector<8x256xf32>
    %cst_19 = arith.constant 1.000000e+00 : f32
    %26 = vector.broadcast %cst_19 : f32 to vector<8x256xf32>
    %27 = arith.addf %25, %26 : vector<8x256xf32>
    %cst_20 = arith.constant 5.000000e-01 : f32
    %28 = vector.broadcast %cst_20 : f32 to vector<8x256xf32>
    %29 = arith.mulf %28, %27 : vector<8x256xf32>
    %30 = vector.extract_strided_slice %29 {offsets = [0, 0], sizes = [8, 128], strides = [1, 1]} : vector<8x256xf32> to vector<8x128xf32>
    %31 = vector.extract_strided_slice %29 {offsets = [0, 128], sizes = [8, 128], strides = [1, 1]} : vector<8x256xf32> to vector<8x128xf32>
    %32 = vector.extract_strided_slice %16 {offsets = [0, 256], sizes = [8, 128], strides = [1, 1]} : vector<8x384xf32> to vector<8x128xf32>
    %33 = arith.mulf %30, %21 : vector<8x128xf32>
    %34 = arith.addf %32, %33 : vector<8x128xf32>
    %35 = math.tanh %34 : vector<8x128xf32>
    %cst_21 = arith.constant 1.000000e+00 : f32
    %36 = vector.broadcast %cst_21 : f32 to vector<8x128xf32>
    %37 = arith.subf %36, %31 : vector<8x128xf32>
    %38 = arith.mulf %37, %35 : vector<8x128xf32>
    %39 = arith.mulf %31, %0 : vector<8x128xf32>
    %40 = arith.addf %38, %39 : vector<8x128xf32>
    %c0_22 = arith.constant 0 : index
    %c0_23 = arith.constant 0 : index
    %41 = vector.load %arg9[%c0_22, %c0_23] : memref<8x128xf32, #tpu.memory_space<vmem>>, vector<8x128xf32>
    tpu.vector_store %arg9[%c0_22, %c0_23], %40 {strides = array<i32>} : memref<8x128xf32, #tpu.memory_space<vmem>>, vector<8x128xf32>,
    return
  }
  func.func @transform_0(%arg0: i32) -> (i32, i32) {
    %c0_i32 = arith.constant 0 : i32
    %c0_i32_0 = arith.constant 0 : i32
    return %arg0, %c0_i32 : i32, i32
  }
  func.func @transform_1(%arg0: i32) -> (i32, i32) {
    %c0_i32 = arith.constant 0 : i32
    %c0_i32_0 = arith.constant 0 : i32
    return %arg0, %c0_i32 : i32, i32
  }
  func.func @transform_2(%arg0: i32) -> (i32, i32) {
    %c0_i32 = arith.constant 0 : i32
    %c0_i32_0 = arith.constant 0 : i32
    %c0_i32_1 = arith.constant 0 : i32
    return %c0_i32, %c0_i32_0 : i32, i32
  }
  func.func @transform_3(%arg0: i32) -> (i32, i32) {
    %c0_i32 = arith.constant 0 : i32
    %c0_i32_0 = arith.constant 0 : i32
    %c0_i32_1 = arith.constant 0 : i32
    return %c0_i32, %c0_i32_0 : i32, i32
  }
  func.func @transform_4(%arg0: i32) -> (i32, i32) {
    %c0_i32 = arith.constant 0 : i32
    %c0_i32_0 = arith.constant 0 : i32
    %c0_i32_1 = arith.constant 0 : i32
    return %c0_i32, %c0_i32_0 : i32, i32
  }
  func.func @transform_5(%arg0: i32) -> (i32, i32) {
    %c0_i32 = arith.constant 0 : i32
    %c0_i32_0 = arith.constant 0 : i32
    %c0_i32_1 = arith.constant 0 : i32
    return %c0_i32, %c0_i32_0 : i32, i32
  }
  func.func @transform_6(%arg0: i32) -> (i32, i32) {
    %c0_i32 = arith.constant 0 : i32
    %c0_i32_0 = arith.constant 0 : i32
    %c0_i32_1 = arith.constant 0 : i32
    return %c0_i32, %c0_i32_0 : i32, i32
  }
  func.func @transform_7(%arg0: i32) -> (i32, i32) {
    %c0_i32 = arith.constant 0 : i32
    %c0_i32_0 = arith.constant 0 : i32
    %c0_i32_1 = arith.constant 0 : i32
    return %c0_i32, %c0_i32_0 : i32, i32
  }
  func.func @transform_8(%arg0: i32) -> (i32, i32) {
    %c0_i32 = arith.constant 0 : i32
    %c0_i32_0 = arith.constant 0 : i32
    return %arg0, %c0_i32 : i32, i32
  }
}

</mosaic_0001>

<llo_original>
// kernel: encoder_forward.1
$region0: #{encoder_forward.1}
  #allocation0 [shape = 'u32[]', space=smem, size = 0x4, offset = 0x4, fixed_abs, tag = 'smem constant byte address 0x4 - core index']
  #allocation1 [shape = 'u32[144,128]{1,0:T(1,128)}', space=vmem, size = 0x12000, scoped, tag = 'internal scratch']
  %s0 = inlined_call_operand.vmem [shape: bf16[8,16], index: 0, kind: input, shape index: {}]
  %s1 = inlined_call_operand.vmem [shape: f32[8,128], index: 1, kind: input, shape index: {}, may-alias: {1,8}]
  %s2 = inlined_call_operand.vmem [shape: bf16[16,128], index: 2, kind: input, shape index: {}]
  %s3 = inlined_call_operand.vmem [shape: f32[1,128], index: 3, kind: input, shape index: {}]
  %s4 = inlined_call_operand.hbm [shape: bf16[256,384], index: 4, kind: input, shape index: {}]
  %s5 = inlined_call_operand.hbm [shape: bf16[128,128], index: 5, kind: input, shape index: {}]
  %s6 = inlined_call_operand.vmem [shape: f32[1,384], index: 6, kind: input, shape index: {}]
  %s7 = inlined_call_operand.vmem [shape: f32[1,128], index: 7, kind: input, shape index: {}]
  %s8 = inlined_call_operand.vmem [shape: f32[8,128], index: 8, kind: output, shape index: {}, may-alias: {1,8}]
  %s9 = sld [smem:[#allocation0]]
  $region50: #{encoder_forward.1} parent=0
    _
  %s11 = ssub.s32 1, %s9
  %s12 = scalar_select 0, %s11, %s9
  $region1: #{encoder_forward.1} parent=0
    #allocation2 [shape = 'u8[196608]{0}', space=vmem, size = 0x30000, scoped, tag = 'input window, operand 4, single buffered']
    #allocation3 [shape = 's32[1]{0}', space=sflag, size = 0x4, scoped, tag = 'scoped memory for encoder_forward.1']
    #allocation4 [shape = 'u8[32768]{0}', space=vmem, size = 0x8000, scoped, tag = 'input window, operand 5, single buffered']
    #allocation5 [shape = 's32[1]{0}', space=sflag, size = 0x4, scoped, tag = 'scoped memory for encoder_forward.1']
    %13 = vsyncpa [#allocation3], 0
    %14 = vsyncpa [#allocation5], 0
    // Predicated region
    $region2: #{encoder_forward.1} parent=1 // pred_check
      _
    $region3: #{encoder_forward.1} parent=1 // pred_check_branch
      %16 = sbr.rel (0) target = $region5
    $region4: #{encoder_forward.1} parent=1 // pred_region
      _
    $region5: #{encoder_forward.1} parent=1 // pred_fallthru
      _
    // Predicated region
    $region6: #{encoder_forward.1} parent=1 // pred_check
      _
    $region7: #{encoder_forward.1} parent=1 // pred_check_branch
      %18 = sbr.rel (0) target = $region9
    $region8: #{encoder_forward.1} parent=1 // pred_region
      _
    $region9: #{encoder_forward.1} parent=1 // pred_fallthru
      _
    // Predicated region
    $region10: #{encoder_forward.1} parent=1 // pred_check
      _
    $region11: #{encoder_forward.1} parent=1 // pred_check_branch
      %20 = sbr.rel (0) target = $region13
    $region12: #{encoder_forward.1} parent=1 // pred_region
      _
    $region13: #{encoder_forward.1} parent=1 // pred_fallthru
      _
    // Predicated region
    $region14: #{encoder_forward.1} parent=1 // pred_check
      _
    $region15: #{encoder_forward.1} parent=1 // pred_check_branch
      %22 = sbr.rel (0) target = $region17
    $region16: #{encoder_forward.1} parent=1 // pred_region
      _
    $region17: #{encoder_forward.1} parent=1 // pred_fallthru
      _
    // Predicated region
    $region18: #{encoder_forward.1} parent=1 // pred_check
      _
    $region19: #{encoder_forward.1} parent=1 // pred_check_branch
      %24 = sbr.rel (0) target = $region21
    $region20: #{encoder_forward.1} parent=1 // pred_region
      %s26 = ssub.s32 6144, 6144
      %27 = vsyncadd [#allocation3], %s26
      %s28 = sshll.u32 [#allocation2], 4
      %s29 = int_to_ptr.vmem [resolvable:$true] %s28
      %34 = dma.hbm_to_vmem [thread:$0]  %s4, 6144, %s29, [#allocation3], 192, 192, 12
    $region21: #{encoder_forward.1} parent=1 // pred_fallthru
      _
    // Predicated region
    $region22: #{encoder_forward.1} parent=1 // pred_check
      _
    $region23: #{encoder_forward.1} parent=1 // pred_check_branch
      %36 = sbr.rel (0) target = $region25
    $region24: #{encoder_forward.1} parent=1 // pred_region
      %s38 = ssub.s32 1024, 1024
      %39 = vsyncadd [#allocation5], %s38
      %s40 = sshll.u32 [#allocation4], 4
      %s41 = int_to_ptr.vmem [resolvable:$true] %s40
      %46 = dma.hbm_to_vmem [thread:$0]  %s5, 1024, %s41, [#allocation5], 64, 64, 4
    $region25: #{encoder_forward.1} parent=1 // pred_fallthru
      _
    // Predicated region
    $region26: #{encoder_forward.1} parent=1 // pred_check
      _
    $region27: #{encoder_forward.1} parent=1 // pred_check_branch
      %48 = sbr.rel (0) target = $region29
    $region28: #{encoder_forward.1} parent=1 // pred_region
      _
    $region29: #{encoder_forward.1} parent=1 // pred_fallthru
      _
    // Predicated region
    $region30: #{encoder_forward.1} parent=1 // pred_check
      _
    $region31: #{encoder_forward.1} parent=1 // pred_check_branch
      %50 = sbr.rel (0) target = $region33
    $region32: #{encoder_forward.1} parent=1 // pred_region
      _
    $region33: #{encoder_forward.1} parent=1 // pred_fallthru
      _
    // Predicated region
    $region34: #{encoder_forward.1} parent=1 // pred_check
      _
    $region35: #{encoder_forward.1} parent=1 // pred_check_branch
      %52 = sbr.rel (0) target = $region37
    $region36: #{encoder_forward.1} parent=1 // pred_region
      %53 = dma.done [#allocation3], 6144
    $region37: #{encoder_forward.1} parent=1 // pred_fallthru
      _
    // Predicated region
    $region38: #{encoder_forward.1} parent=1 // pred_check
      _
    $region39: #{encoder_forward.1} parent=1 // pred_check_branch
      %55 = sbr.rel (0) target = $region41
    $region40: #{encoder_forward.1} parent=1 // pred_region
      %56 = dma.done [#allocation5], 1024
    $region41: #{encoder_forward.1} parent=1 // pred_fallthru
      _
    %v58 = vld [vmem:[%s1] sm:$0xff]
    %v59 = vpack.c.bf16 %v58, %v58
    %v60 = vld [vmem:[%s0] sm:$0xf]
    %v61 = vld [vmem:[%s2] sm:$0xf]
    %v62 = vld [vmem:[%s2 + $0x4] sm:$0xf]
    %v63 = vld [vmem:[%s3] sm:$0x1]
    %v65 = vlaneseq
    %v66 = vshrl.u32 %v65, 7
    %v67 = vsub.s32 0, %v66
    %v68 = vrot.slane %v63, %v67
    %v72 = vunpack.c.l.b16 %v61
    %v73 = vunpack.c.l.b16 %v62
    %v74 = vpack.c.b16 %v73, %v72
    %vm76 = vcmask 130048
    %v78 = vsel %vm76, %v60, 0
    %80 = vmatprep.subr.bf16.mxu0 0
    %81 = vmatpush1.bf16.msra.mxu0 0
    %82 = vmatprep.subr.bf16.mxu0 0
    %83 = vmatpush1.bf16.msra.mxu0 0
    %84 = vmatprep.subr.bf16.mxu0 0
    %85 = vmatpush1.bf16.msra.mxu0 0
    %86 = vmatprep.subr.bf16.mxu0 0
    %87 = vmatpush1.bf16.msra.mxu0 0
    %88 = vmatprep.subr.bf16.mxu0 0
    %89 = vmatpush1.bf16.msra.mxu0 0
    %90 = vmatprep.subr.bf16.mxu0 0
    %91 = vmatpush1.bf16.msra.mxu0 0
    %92 = vmatprep.subr.bf16.mxu0 0
    %93 = vmatpush1.bf16.msra.mxu0 0
    %94 = vmatprep.subr.bf16.mxu0 0
    %95 = vmatpush1.bf16.msra.mxu0 %v74
    %96 = vmatprep.subr.bf16.mxu0 0
    %97 = vmatpush2.bf16.msra.mxu0 0
    %98 = vmatprep.subr.bf16.mxu0 0
    %99 = vmatpush2.bf16.msra.mxu0 0
    %100 = vmatprep.subr.bf16.mxu0 0
    %101 = vmatpush2.bf16.msra.mxu0 0
    %102 = vmatprep.subr.bf16.mxu0 0
    %103 = vmatpush2.bf16.msra.mxu0 0
    %104 = vmatprep.subr.bf16.mxu0 0
    %105 = vmatpush2.bf16.msra.mxu0 0
    %106 = vmatprep.subr.bf16.mxu0 0
    %107 = vmatpush2.bf16.msra.mxu0 0
    %108 = vmatprep.subr.bf16.mxu0 0
    %109 = vmatpush2.bf16.msra.mxu0 0
    %110 = vmatprep.subr.bf16.mxu0 0
    %111 = vmatpush2.bf16.msra.mxu0 0
    %112 = vmatprep.mubr.bf16.mxu0 0
    %113 = vmatmul.mubr.bf16.gmra.mxu0 %v78
    %v114 = vpop.f32.mrf.mxu0
    %v115 = vadd.f32 %v68, %v114
    %v116 = vpop.f32.mrf.mxu0
    %v117 = vpop.f32.mrf.mxu0
    %v118 = vpop.f32.mrf.mxu0
    %119 = vdwg.mxu0
    %v120 = vmax.f32 %v115, 0.0
    %v121 = vpack.c.bf16 %v120, %v120
    %v122 = vld [vmem:[#allocation2] sm:$0xff]
    %v123 = vld [vmem:[#allocation2 + $0x8] sm:$0xf]
    %v124 = vld [vmem:[#allocation2 + $0xc] sm:$0xff]
    %v125 = vld [vmem:[#allocation2 + $0x14] sm:$0xf]
    %v126 = vld [vmem:[#allocation2 + $0x18] sm:$0xff]
    %v127 = vld [vmem:[#allocation2 + $0x20] sm:$0xf]
    %v128 = vld [vmem:[#allocation2 + $0x24] sm:$0xff]
    %v129 = vld [vmem:[#allocation2 + $0x2c] sm:$0xf]
    %v130 = vld [vmem:[#allocation2 + $0x30] sm:$0xff]
    %v131 = vld [vmem:[#allocation2 + $0x38] sm:$0xf]
    %v132 = vld [vmem:[#allocation2 + $0x3c] sm:$0xff]
    %v133 = vld [vmem:[#allocation2 + $0x44] sm:$0xf]
    %v134 = vld [vmem:[#allocation2 + $0x48] sm:$0xff]
    %v135 = vld [vmem:[#allocation2 + $0x50] sm:$0xf]
    %v136 = vld [vmem:[#allocation2 + $0x54] sm:$0xff]
    %v137 = vld [vmem:[#allocation2 + $0x5c] sm:$0xf]
    %v138 = vld [vmem:[#allocation2 + $0x60] sm:$0xff]
    %v139 = vld [vmem:[#allocation2 + $0x68] sm:$0xf]
    %v140 = vld [vmem:[#allocation2 + $0x6c] sm:$0xff]
    %v141 = vld [vmem:[#allocation2 + $0x74] sm:$0xf]
    %v142 = vld [vmem:[#allocation2 + $0x78] sm:$0xff]
    %v143 = vld [vmem:[#allocation2 + $0x80] sm:$0xf]
    %v144 = vld [vmem:[#allocation2 + $0x84] sm:$0xff]
    %v145 = vld [vmem:[#allocation2 + $0x8c] sm:$0xf]
    %v146 = vld [vmem:[#allocation2 + $0x90] sm:$0xff]
    %v147 = vld [vmem:[#allocation2 + $0x98] sm:$0xf]
    %v148 = vld [vmem:[#allocation2 + $0x9c] sm:$0xff]
    %v149 = vld [vmem:[#allocation2 + $0xa4] sm:$0xf]
    %v150 = vld [vmem:[#allocation2 + $0xa8] sm:$0xff]
    %v151 = vld [vmem:[#allocation2 + $0xb0] sm:$0xf]
    %v152 = vld [vmem:[#allocation2 + $0xb4] sm:$0xff]
    %v153 = vld [vmem:[#allocation2 + $0xbc] sm:$0xf]
    %v154 = vld [vmem:[#allocation2 + $0xc0] sm:$0xff]
    %v155 = vld [vmem:[#allocation2 + $0xc8] sm:$0xf]
    %v156 = vld [vmem:[#allocation2 + $0xcc] sm:$0xff]
    %v157 = vld [vmem:[#allocation2 + $0xd4] sm:$0xf]
    %v158 = vld [vmem:[#allocation2 + $0xd8] sm:$0xff]
    %v159 = vld [vmem:[#allocation2 + $0xe0] sm:$0xf]
    %v160 = vld [vmem:[#allocation2 + $0xe4] sm:$0xff]
    %v161 = vld [vmem:[#allocation2 + $0xec] sm:$0xf]
    %v162 = vld [vmem:[#allocation2 + $0xf0] sm:$0xff]
    %v163 = vld [vmem:[#allocation2 + $0xf8] sm:$0xf]
    %v164 = vld [vmem:[#allocation2 + $0xfc] sm:$0xff]
    %v165 = vld [vmem:[#allocation2 + $0x104] sm:$0xf]
    %v166 = vld [vmem:[#allocation2 + $0x108] sm:$0xff]
    %v167 = vld [vmem:[#allocation2 + $0x110] sm:$0xf]
    %v168 = vld [vmem:[#allocation2 + $0x114] sm:$0xff]
    %v169 = vld [vmem:[#allocation2 + $0x11c] sm:$0xf]
    %v170 = vld [vmem:[#allocation2 + $0x120] sm:$0xff]
    %v171 = vld [vmem:[#allocation2 + $0x128] sm:$0xf]
    %v172 = vld [vmem:[#allocation2 + $0x12c] sm:$0xff]
    %v173 = vld [vmem:[#allocation2 + $0x134] sm:$0xf]
    %v174 = vld [vmem:[#allocation2 + $0x138] sm:$0xff]
    %v175 = vld [vmem:[#allocation2 + $0x140] sm:$0xf]
    %v176 = vld [vmem:[#allocation2 + $0x144] sm:$0xff]
    %v177 = vld [vmem:[#allocation2 + $0x14c] sm:$0xf]
    %v178 = vld [vmem:[#allocation2 + $0x150] sm:$0xff]
    %v179 = vld [vmem:[#allocation2 + $0x158] sm:$0xf]
    %v180 = vld [vmem:[#allocation2 + $0x15c] sm:$0xff]
    %v181 = vld [vmem:[#allocation2 + $0x164] sm:$0xf]
    %v182 = vld [vmem:[#allocation2 + $0x168] sm:$0xff]
    %v183 = vld [vmem:[#allocation2 + $0x170] sm:$0xf]
    %v184 = vld [vmem:[#allocation2 + $0x174] sm:$0xff]
    %v185 = vld [vmem:[#allocation2 + $0x17c] sm:$0xf]
    %v186 = vld [vmem:[%s6] sm:$0x7]
    %v188 = vlaneseq
    %v189 = vshrl.u32 %v188, 7
    %v190 = vsub.s32 0, %v189
    %v191 = vrot.slane %v186, %v190
    %v192 = vlaneseq
    %v193 = vshrl.u32 %v192, 7
    %v194 = vsub.s32 1, %v193
    %v195 = vrot.slane %v186, %v194
    %v196 = vlaneseq
    %v197 = vshrl.u32 %v196, 7
    %v198 = vsub.s32 2, %v197
    %v199 = vrot.slane %v186, %v198
    %v267 = vunpack.c.l.b16 %v122
    %v268 = vunpack.c.h.b16 %v122
    %v269 = vunpack.c.l.b16 %v123
    %v270 = vunpack.c.l.b16 %v124
    %v271 = vunpack.c.h.b16 %v124
    %v272 = vunpack.c.l.b16 %v125
    %v273 = vunpack.c.l.b16 %v126
    %v274 = vunpack.c.h.b16 %v126
    %v275 = vunpack.c.l.b16 %v127
    %v276 = vunpack.c.l.b16 %v128
    %v277 = vunpack.c.h.b16 %v128
    %v278 = vunpack.c.l.b16 %v129
    %v279 = vunpack.c.l.b16 %v130
    %v280 = vunpack.c.h.b16 %v130
    %v281 = vunpack.c.l.b16 %v131
    %v282 = vunpack.c.l.b16 %v132
    %v283 = vunpack.c.h.b16 %v132
    %v284 = vunpack.c.l.b16 %v133
    %v285 = vunpack.c.l.b16 %v134
    %v286 = vunpack.c.h.b16 %v134
    %v287 = vunpack.c.l.b16 %v135
    %v288 = vunpack.c.l.b16 %v136
    %v289 = vunpack.c.h.b16 %v136
    %v290 = vunpack.c.l.b16 %v137
    %v291 = vunpack.c.l.b16 %v138
    %v292 = vunpack.c.h.b16 %v138
    %v293 = vunpack.c.l.b16 %v139
    %v294 = vunpack.c.l.b16 %v140
    %v295 = vunpack.c.h.b16 %v140
    %v296 = vunpack.c.l.b16 %v141
    %v297 = vunpack.c.l.b16 %v142
    %v298 = vunpack.c.h.b16 %v142
    %v299 = vunpack.c.l.b16 %v143
    %v300 = vunpack.c.l.b16 %v144
    %v301 = vunpack.c.h.b16 %v144
    %v302 = vunpack.c.l.b16 %v145
    %v303 = vunpack.c.l.b16 %v146
    %v304 = vunpack.c.h.b16 %v146
    %v305 = vunpack.c.l.b16 %v147
    %v306 = vunpack.c.l.b16 %v148
    %v307 = vunpack.c.h.b16 %v148
    %v308 = vunpack.c.l.b16 %v149
    %v309 = vunpack.c.l.b16 %v150
    %v310 = vunpack.c.h.b16 %v150
    %v311 = vunpack.c.l.b16 %v151
    %v312 = vunpack.c.l.b16 %v152
    %v313 = vunpack.c.h.b16 %v152
    %v314 = vunpack.c.l.b16 %v153
    %v315 = vunpack.c.l.b16 %v154
    %v316 = vunpack.c.h.b16 %v154
    %v317 = vunpack.c.l.b16 %v155
    %v318 = vunpack.c.l.b16 %v156
    %v319 = vunpack.c.h.b16 %v156
    %v320 = vunpack.c.l.b16 %v157
    %v321 = vunpack.c.l.b16 %v158
    %v322 = vunpack.c.h.b16 %v158
    %v323 = vunpack.c.l.b16 %v159
    %v324 = vunpack.c.l.b16 %v160
    %v325 = vunpack.c.h.b16 %v160
    %v326 = vunpack.c.l.b16 %v161
    %v327 = vunpack.c.l.b16 %v162
    %v328 = vunpack.c.h.b16 %v162
    %v329 = vunpack.c.l.b16 %v163
    %v330 = vunpack.c.l.b16 %v164
    %v331 = vunpack.c.h.b16 %v164
    %v332 = vunpack.c.l.b16 %v165
    %v333 = vunpack.c.l.b16 %v166
    %v334 = vunpack.c.h.b16 %v166
    %v335 = vunpack.c.l.b16 %v167
    %v336 = vunpack.c.l.b16 %v168
    %v337 = vunpack.c.h.b16 %v168
    %v338 = vunpack.c.l.b16 %v169
    %v339 = vunpack.c.l.b16 %v170
    %v340 = vunpack.c.h.b16 %v170
    %v341 = vunpack.c.l.b16 %v171
    %v342 = vunpack.c.l.b16 %v172
    %v343 = vunpack.c.h.b16 %v172
    %v344 = vunpack.c.l.b16 %v173
    %v345 = vunpack.c.l.b16 %v174
    %v346 = vunpack.c.h.b16 %v174
    %v347 = vunpack.c.l.b16 %v175
    %v348 = vunpack.c.l.b16 %v176
    %v349 = vunpack.c.h.b16 %v176
    %v350 = vunpack.c.l.b16 %v177
    %v351 = vunpack.c.l.b16 %v178
    %v352 = vunpack.c.h.b16 %v178
    %v353 = vunpack.c.l.b16 %v179
    %v354 = vunpack.c.l.b16 %v180
    %v355 = vunpack.c.h.b16 %v180
    %v356 = vunpack.c.l.b16 %v181
    %v357 = vunpack.c.l.b16 %v182
    %v358 = vunpack.c.h.b16 %v182
    %v359 = vunpack.c.l.b16 %v183
    %v360 = vunpack.c.l.b16 %v184
    %v361 = vunpack.c.h.b16 %v184
    %v362 = vunpack.c.l.b16 %v185
    %v363 = vpack.c.b16 %v270, %v267
    %v364 = vpack.c.b16 %v271, %v268
    %v365 = vpack.c.b16 %v272, %v269
    %v366 = vpack.c.b16 %v276, %v273
    %v367 = vpack.c.b16 %v277, %v274
    %v368 = vpack.c.b16 %v278, %v275
    %v369 = vpack.c.b16 %v282, %v279
    %v370 = vpack.c.b16 %v283, %v280
    %v371 = vpack.c.b16 %v284, %v281
    %v372 = vpack.c.b16 %v288, %v285
    %v373 = vpack.c.b16 %v289, %v286
    %v374 = vpack.c.b16 %v290, %v287
    %v375 = vpack.c.b16 %v294, %v291
    %v376 = vpack.c.b16 %v295, %v292
    %v377 = vpack.c.b16 %v296, %v293
    %v378 = vpack.c.b16 %v300, %v297
    %v379 = vpack.c.b16 %v301, %v298
    %v380 = vpack.c.b16 %v302, %v299
    %v381 = vpack.c.b16 %v306, %v303
    %v382 = vpack.c.b16 %v307, %v304
    %v383 = vpack.c.b16 %v308, %v305
    %v384 = vpack.c.b16 %v312, %v309
    %v385 = vpack.c.b16 %v313, %v310
    %v386 = vpack.c.b16 %v314, %v311
    %v387 = vpack.c.b16 %v318, %v315
    %v388 = vpack.c.b16 %v319, %v316
    %v389 = vpack.c.b16 %v320, %v317
    %v390 = vpack.c.b16 %v324, %v321
    %v391 = vpack.c.b16 %v325, %v322
    %v392 = vpack.c.b16 %v326, %v323
    %v393 = vpack.c.b16 %v330, %v327
    %v394 = vpack.c.b16 %v331, %v328
    %v395 = vpack.c.b16 %v332, %v329
    %v396 = vpack.c.b16 %v336, %v333
    %v397 = vpack.c.b16 %v337, %v334
    %v398 = vpack.c.b16 %v338, %v335
    %v399 = vpack.c.b16 %v342, %v339
    %v400 = vpack.c.b16 %v343, %v340
    %v401 = vpack.c.b16 %v344, %v341
    %v402 = vpack.c.b16 %v348, %v345
    %v403 = vpack.c.b16 %v349, %v346
    %v404 = vpack.c.b16 %v350, %v347
    %v405 = vpack.c.b16 %v354, %v351
    %v406 = vpack.c.b16 %v355, %v352
    %v407 = vpack.c.b16 %v356, %v353
    %v408 = vpack.c.b16 %v360, %v357
    %v409 = vpack.c.b16 %v361, %v358
    %v410 = vpack.c.b16 %v362, %v359
    %459 = vmatprep.subr.bf16.mxu0 %v385
    %460 = vmatpush1.bf16.msra.mxu0 %v384
    %461 = vmatprep.subr.bf16.mxu0 %v382
    %462 = vmatpush1.bf16.msra.mxu0 %v381
    %463 = vmatprep.subr.bf16.mxu0 %v379
    %464 = vmatpush1.bf16.msra.mxu0 %v378
    %465 = vmatprep.subr.bf16.mxu0 %v376
    %466 = vmatpush1.bf16.msra.mxu0 %v375
    %467 = vmatprep.subr.bf16.mxu0 %v373
    %468 = vmatpush1.bf16.msra.mxu0 %v372
    %469 = vmatprep.subr.bf16.mxu0 %v370
    %470 = vmatpush1.bf16.msra.mxu0 %v369
    %471 = vmatprep.subr.bf16.mxu0 %v367
    %472 = vmatpush1.bf16.msra.mxu0 %v366
    %473 = vmatprep.subr.bf16.mxu0 %v364
    %474 = vmatpush1.bf16.msra.mxu0 %v363
    %475 = vmatprep.subr.bf16.mxu0 %v409
    %476 = vmatpush2.bf16.msra.mxu0 %v408
    %477 = vmatprep.subr.bf16.mxu0 %v406
    %478 = vmatpush2.bf16.msra.mxu0 %v405
    %479 = vmatprep.subr.bf16.mxu0 %v403
    %480 = vmatpush2.bf16.msra.mxu0 %v402
    %481 = vmatprep.subr.bf16.mxu0 %v400
    %482 = vmatpush2.bf16.msra.mxu0 %v399
    %483 = vmatprep.subr.bf16.mxu0 %v397
    %484 = vmatpush2.bf16.msra.mxu0 %v396
    %485 = vmatprep.subr.bf16.mxu0 %v394
    %486 = vmatpush2.bf16.msra.mxu0 %v393
    %487 = vmatprep.subr.bf16.mxu0 %v391
    %488 = vmatpush2.bf16.msra.mxu0 %v390
    %489 = vmatprep.subr.bf16.mxu0 %v388
    %490 = vmatpush2.bf16.msra.mxu0 %v387
    %491 = vmatprep.mubr.bf16.mxu0 %v59
    %492 = vmatmul.mubr.bf16.gmra.mxu0 %v121
    %v493 = vpop.f32.mrf.mxu0
    %v494 = vadd.f32 %v191, %v493
    %v495 = vpop.f32.mrf.mxu0
    %v496 = vadd.f32 %v195, %v495
    %v497 = vpop.f32.mrf.mxu0
    %v498 = vpop.f32.mrf.mxu0
    %499 = vdwg.mxu0
    %500 = vmatprep.subr.bf16.mxu0 0
    %501 = vmatpush1.bf16.msra.mxu0 %v386
    %502 = vmatprep.subr.bf16.mxu0 0
    %503 = vmatpush1.bf16.msra.mxu0 %v383
    %504 = vmatprep.subr.bf16.mxu0 0
    %505 = vmatpush1.bf16.msra.mxu0 %v380
    %506 = vmatprep.subr.bf16.mxu0 0
    %507 = vmatpush1.bf16.msra.mxu0 %v377
    %508 = vmatprep.subr.bf16.mxu0 0
    %509 = vmatpush1.bf16.msra.mxu0 %v374
    %510 = vmatprep.subr.bf16.mxu0 0
    %511 = vmatpush1.bf16.msra.mxu0 %v371
    %512 = vmatprep.subr.bf16.mxu0 0
    %513 = vmatpush1.bf16.msra.mxu0 %v368
    %514 = vmatprep.subr.bf16.mxu0 0
    %515 = vmatpush1.bf16.msra.mxu0 %v365
    %516 = vmatprep.subr.bf16.mxu0 0
    %517 = vmatpush2.bf16.msra.mxu0 %v410
    %518 = vmatprep.subr.bf16.mxu0 0
    %519 = vmatpush2.bf16.msra.mxu0 %v407
    %520 = vmatprep.subr.bf16.mxu0 0
    %521 = vmatpush2.bf16.msra.mxu0 %v404
    %522 = vmatprep.subr.bf16.mxu0 0
    %523 = vmatpush2.bf16.msra.mxu0 %v401
    %524 = vmatprep.subr.bf16.mxu0 0
    %525 = vmatpush2.bf16.msra.mxu0 %v398
    %526 = vmatprep.subr.bf16.mxu0 0
    %527 = vmatpush2.bf16.msra.mxu0 %v395
    %528 = vmatprep.subr.bf16.mxu0 0
    %529 = vmatpush2.bf16.msra.mxu0 %v392
    %530 = vmatprep.subr.bf16.mxu0 0
    %531 = vmatpush2.bf16.msra.mxu0 %v389
    %532 = vmatprep.mubr.bf16.mxu0 %v59
    %533 = vmatmul.mubr.bf16.gmra.mxu0 %v121
    %v534 = vpop.f32.mrf.mxu0
    %v535 = vadd.f32 %v199, %v534
    %v536 = vpop.f32.mrf.mxu0
    %v537 = vpop.f32.mrf.mxu0
    %v538 = vpop.f32.mrf.mxu0
    %539 = vdwg.mxu0
    %v540 = vld [vmem:[#allocation4] sm:$0xf]
    %v541 = vld [vmem:[#allocation4 + $0x4] sm:$0xf]
    %v542 = vld [vmem:[#allocation4 + $0x8] sm:$0xf]
    %v543 = vld [vmem:[#allocation4 + $0xc] sm:$0xf]
    %v544 = vld [vmem:[#allocation4 + $0x10] sm:$0xf]
    %v545 = vld [vmem:[#allocation4 + $0x14] sm:$0xf]
    %v546 = vld [vmem:[#allocation4 + $0x18] sm:$0xf]
    %v547 = vld [vmem:[#allocation4 + $0x1c] sm:$0xf]
    %v548 = vld [vmem:[#allocation4 + $0x20] sm:$0xf]
    %v549 = vld [vmem:[#allocation4 + $0x24] sm:$0xf]
    %v550 = vld [vmem:[#allocation4 + $0x28] sm:$0xf]
    %v551 = vld [vmem:[#allocation4 + $0x2c] sm:$0xf]
    %v552 = vld [vmem:[#allocation4 + $0x30] sm:$0xf]
    %v553 = vld [vmem:[#allocation4 + $0x34] sm:$0xf]
    %v554 = vld [vmem:[#allocation4 + $0x38] sm:$0xf]
    %v555 = vld [vmem:[#allocation4 + $0x3c] sm:$0xf]
    %v556 = vld [vmem:[%s7] sm:$0x1]
    %v558 = vlaneseq
    %v559 = vshrl.u32 %v558, 7
    %v560 = vsub.s32 0, %v559
    %v561 = vrot.slane %v556, %v560
    %v579 = vunpack.c.l.b16 %v540
    %v580 = vunpack.c.l.b16 %v541
    %v581 = vunpack.c.l.b16 %v542
    %v582 = vunpack.c.l.b16 %v543
    %v583 = vunpack.c.l.b16 %v544
    %v584 = vunpack.c.l.b16 %v545
    %v585 = vunpack.c.l.b16 %v546
    %v586 = vunpack.c.l.b16 %v547
    %v587 = vunpack.c.l.b16 %v548
    %v588 = vunpack.c.l.b16 %v549
    %v589 = vunpack.c.l.b16 %v550
    %v590 = vunpack.c.l.b16 %v551
    %v591 = vunpack.c.l.b16 %v552
    %v592 = vunpack.c.l.b16 %v553
    %v593 = vunpack.c.l.b16 %v554
    %v594 = vunpack.c.l.b16 %v555
    %v595 = vpack.c.b16 %v580, %v579
    %v596 = vpack.c.b16 %v582, %v581
    %v597 = vpack.c.b16 %v584, %v583
    %v598 = vpack.c.b16 %v586, %v585
    %v599 = vpack.c.b16 %v588, %v587
    %v600 = vpack.c.b16 %v590, %v589
    %v601 = vpack.c.b16 %v592, %v591
    %v602 = vpack.c.b16 %v594, %v593
    %611 = vmatprep.subr.bf16.mxu0 0
    %612 = vmatpush1.bf16.msra.mxu0 %v602
    %613 = vmatprep.subr.bf16.mxu0 0
    %614 = vmatpush1.bf16.msra.mxu0 %v601
    %615 = vmatprep.subr.bf16.mxu0 0
    %616 = vmatpush1.bf16.msra.mxu0 %v600
    %617 = vmatprep.subr.bf16.mxu0 0
    %618 = vmatpush1.bf16.msra.mxu0 %v599
    %619 = vmatprep.subr.bf16.mxu0 0
    %620 = vmatpush1.bf16.msra.mxu0 %v598
    %621 = vmatprep.subr.bf16.mxu0 0
    %622 = vmatpush1.bf16.msra.mxu0 %v597
    %623 = vmatprep.subr.bf16.mxu0 0
    %624 = vmatpush1.bf16.msra.mxu0 %v596
    %625 = vmatprep.subr.bf16.mxu0 0
    %626 = vmatpush1.bf16.msra.mxu0 %v595
    %627 = vmatprep.subr.bf16.mxu0 0
    %628 = vmatpush2.bf16.msra.mxu0 0
    %629 = vmatprep.subr.bf16.mxu0 0
    %630 = vmatpush2.bf16.msra.mxu0 0
    %631 = vmatprep.subr.bf16.mxu0 0
    %632 = vmatpush2.bf16.msra.mxu0 0
    %633 = vmatprep.subr.bf16.mxu0 0
    %634 = vmatpush2.bf16.msra.mxu0 0
    %635 = vmatprep.subr.bf16.mxu0 0
    %636 = vmatpush2.bf16.msra.mxu0 0
    %637 = vmatprep.subr.bf16.mxu0 0
    %638 = vmatpush2.bf16.msra.mxu0 0
    %639 = vmatprep.subr.bf16.mxu0 0
    %640 = vmatpush2.bf16.msra.mxu0 0
    %641 = vmatprep.subr.bf16.mxu0 0
    %642 = vmatpush2.bf16.msra.mxu0 0
    %643 = vmatprep.mubr.bf16.mxu0 0
    %644 = vmatmul.mubr.bf16.gmra.mxu0 %v59
    %v645 = vpop.f32.mrf.mxu0
    %v646 = vadd.f32 %v561, %v645
    %v647 = vpop.f32.mrf.mxu0
    %v648 = vpop.f32.mrf.mxu0
    %v649 = vpop.f32.mrf.mxu0
    %650 = vdwg.mxu0
    %v651 = vmul.f32 %v494, 0.5
    %v652 = vmul.f32 %v496, 0.5
    %v653 = vtanh.pop %v651
    %v654 = vtanh.pop %v652
    %v655 = vadd.f32 %v653, 1.0
    %v656 = vadd.f32 %v654, 1.0
    %v657 = vmul.f32 %v655, 0.5
    %v658 = vmul.f32 %v656, 0.5
    %v659 = vmul.f32 %v657, %v646
    %v660 = vadd.f32 %v535, %v659
    %v661 = vtanh.pop %v660
    %v662 = vsub.f32 1.0, %v658
    %v663 = vmul.f32 %v662, %v661
    %v664 = vmul.f32 %v658, %v58
    %v665 = vadd.f32 %v663, %v664
    %666 = vst [vmem:[%s8] sm:$0xff] %v665
    // Predicated region
    $region42: #{encoder_forward.1} parent=1 // pred_check
      _
    $region43: #{encoder_forward.1} parent=1 // pred_check_branch
      %668 = sbr.rel (0) target = $region45
    $region44: #{encoder_forward.1} parent=1 // pred_region
      _
    $region45: #{encoder_forward.1} parent=1 // pred_fallthru
      _
    // Predicated region
    $region46: #{encoder_forward.1} parent=1 // pred_check
      _
    $region47: #{encoder_forward.1} parent=1 // pred_check_branch
      %670 = sbr.rel (0) target = $region49
    $region48: #{encoder_forward.1} parent=1 // pred_region
      _
    $region49: #{encoder_forward.1} parent=1 // pred_fallthru
      _
    %671 = vsyncpa [#allocation3], 1
    %672 = vsyncpa [#allocation5], 1

</llo_original>
